<compile_context>
chip_gen: v7x
topology: tpu7x:2x2x1
jax: 0.10.0
libtpu: 0.0.40
codegen_flags: <defaults>
</compile_context>

<pallas_src>
import functools
from typing import NamedTuple, Tuple

import jax
import jax.numpy as jnp
from jax.experimental import pallas as pl
from jax.experimental.pallas import tpu as pltpu

DT = 0.1
LANES = 128                       # vreg lane width
MAX_TILE_ROWS = 2048              # rows per grid step (2048*128*4B = 1 MiB/plane)
VMEM_LIMIT_BYTES = 32 * 1024 * 1024


# ----------------------------------------------------------------------------
# Small helpers
# ----------------------------------------------------------------------------
def _cdiv(a, b):
    return -(-a // b)


def _round_up(a, b):
    return _cdiv(a, b) * b


def _prod(shape):
    p = 1
    for d in shape:
        p *= d
    return p


def _sublane(dtype):
    # Packed-tile second-to-last-dim granularity: 8 (4B), 16 (2B), 32 (1B).
    itemsize = jnp.dtype(dtype).itemsize
    return 8 * max(1, 4 // itemsize)


class _PlanesMeta(NamedTuple):
    lead_shape: Tuple[int, ...]
    batch: int
    rows_pad: int
    tile_rows: int
    dtype: str


def _layout(batch, dtype):
    """Pick (tile_rows, rows_pad) adaptively to minimize padding waste."""
    sub = _sublane(dtype)
    rows = max(1, _cdiv(batch, LANES))
    rows_aligned = _round_up(rows, sub)
    if rows_aligned <= MAX_TILE_ROWS:
        # Single grid step, padding only up to one sublane group.
        return rows_aligned, rows_aligned
    num_tiles = _cdiv(rows_aligned, MAX_TILE_ROWS)
    tile_rows = _round_up(_cdiv(rows_aligned, num_tiles), sub)
    return tile_rows, tile_rows * num_tiles


def _pad_to_planes(arr2d, rows_pad):
    """(C, B) -> lane-dense (C, rows_pad, 128) planes (zero-padded)."""
    c, b = arr2d.shape
    b_pad = rows_pad * LANES
    if b_pad != b:
        arr2d = jnp.pad(arr2d, ((0, 0), (0, b_pad - b)))
    return arr2d.reshape(c, rows_pad, LANES)


# ----------------------------------------------------------------------------
# Fused sincos: one shared Cody-Waite range reduction + two short polynomials.
# Accurate to a few f32 ulps for |theta| up to ~1e4 (Cephes single-precision
# minimax coefficients, |r| <= pi/4).  All VPU ops — no EUP dependency.
# ----------------------------------------------------------------------------
_TWO_OVER_PI = 0.6366197723675814
_PIO2_1 = 1.5703125                      # pi/2 split, exact products for small n
_PIO2_2 = 4.837512969970703125e-4
_PIO2_3 = 7.54978995489188e-8
_S1, _S2, _S3 = -1.6666654611e-1, 8.3321608736e-3, -1.9515295891e-4
_C1, _C2, _C3 = 4.166664568298827e-2, -1.388731625493765e-3, 2.443315711809948e-5


def _sincos(t):
    n = jnp.round(t * _TWO_OVER_PI)
    r = ((t - n * _PIO2_1) - n * _PIO2_2) - n * _PIO2_3
    r2 = r * r
    sin_r = r + r * r2 * (_S1 + r2 * (_S2 + r2 * _S3))
    cos_r = 1.0 - 0.5 * r2 + r2 * r2 * (_C1 + r2 * (_C2 + r2 * _C3))
    q = n.astype(jnp.int32) & 3
    sin_t = jnp.where(q == 0, sin_r,
            jnp.where(q == 1, cos_r,
            jnp.where(q == 2, -sin_r, -cos_r)))
    cos_t = jnp.where(q == 0, cos_r,
            jnp.where(q == 1, -sin_r,
            jnp.where(q == 2, -cos_r, sin_r)))
    return sin_t, cos_t


# ----------------------------------------------------------------------------
# Kernel
# ----------------------------------------------------------------------------
def _dubins_kernel(state_ref, action_ref, out_ref):
    # state_ref:  (3, tile_rows, 128) planes [x, y, theta]
    # action_ref: (1, tile_rows, 128) plane  [a]
    # out_ref:    (3, tile_rows, 128) planes [x', y', theta']
    out_dtype = out_ref.dtype
    theta = state_ref[2].astype(jnp.float32)
    sin_t, cos_t = _sincos(theta)
    out_ref[0] = (state_ref[0].astype(jnp.float32) + DT * cos_t).astype(out_dtype)
    out_ref[1] = (state_ref[1].astype(jnp.float32) + DT * sin_t).astype(out_dtype)
    out_ref[2] = (theta + DT * action_ref[0].astype(jnp.float32)).astype(out_dtype)


def _plane_index_map(i):
    return (0, i, 0)


@functools.lru_cache(maxsize=None)
def _build_step(rows_pad, tile_rows, dtype_name):
    dtype = jnp.dtype(dtype_name)
    n_states = rows_pad * LANES
    itemsize = dtype.itemsize
    return pl.pallas_call(
        _dubins_kernel,
        out_shape=jax.ShapeDtypeStruct((3, rows_pad, LANES), dtype),
        grid=(rows_pad // tile_rows,),
        in_specs=[
            pl.BlockSpec((3, tile_rows, LANES), _plane_index_map),
            pl.BlockSpec((1, tile_rows, LANES), _plane_index_map),
        ],
        out_specs=pl.BlockSpec((3, tile_rows, LANES), _plane_index_map),
        compiler_params=pltpu.CompilerParams(
            dimension_semantics=("parallel",),          # megacore sharding of rows
            vmem_limit_bytes=VMEM_LIMIT_BYTES,          # explicit, covers 14 MiB blocks
            allow_input_fusion=[True, True],            # let XLA fuse producers into DMA
        ),
        cost_estimate=pl.CostEstimate(
            flops=40 * n_states,        # fused sincos polys + 3 FMAs per state
            transcendentals=0,          # sincos is polynomial (VPU), no EUP calls
            bytes_accessed=7 * n_states * itemsize,
        ),
    )


# ----------------------------------------------------------------------------
# Persistent-SoA API (convert once, step many times)
# ----------------------------------------------------------------------------
def dubins_state_to_planes(state, dtype=None):
    """(..., 3) AoS state -> ((3, rows_pad, 128) SoA planes, meta)."""
    lead_shape = state.shape[:-1]
    b = _prod(lead_shape)
    dtype = state.dtype if dtype is None else jnp.dtype(dtype)
    tile_rows, rows_pad = _layout(b, dtype)
    soa = jnp.swapaxes(state.reshape(b, 3).astype(dtype), 0, 1)         # (3, B)
    meta = _PlanesMeta(tuple(lead_shape), b, rows_pad, tile_rows, jnp.dtype(dtype).name)
    return _pad_to_planes(soa, rows_pad), meta


def dubins_action_to_plane(action, meta):
    """(..., 1) action -> (1, rows_pad, 128) SoA plane."""
    a = jnp.broadcast_to(action, meta.lead_shape + (1,))
    a = a.reshape(1, meta.batch).astype(jnp.dtype(meta.dtype))
    return _pad_to_planes(a, meta.rows_pad)


def dubins_step_planes(state_planes, action_plane, meta):
    """One dynamics step entirely in the lane-dense SoA layout."""
    step = _build_step(meta.rows_pad, meta.tile_rows, meta.dtype)
    return step(state_planes, action_plane)


def dubins_planes_to_state(planes, meta):
    """(3, rows_pad, 128) SoA planes -> (..., 3) AoS state."""
    flat = planes.reshape(3, -1)[:, :meta.batch]
    return jnp.swapaxes(flat, 0, 1).reshape(meta.lead_shape + (3,))


# ----------------------------------------------------------------------------
# Boundary (single-call) API, matching the PyTorch module signature
# ----------------------------------------------------------------------------
def dubins_car_dynamics(state, action):
    """state: (..., 3), action: (..., 1)  ->  next state (..., 3)."""
    dtype = jnp.result_type(state.dtype, action.dtype)   # no silent downcast
    planes, meta = dubins_state_to_planes(state, dtype=dtype)
    a_plane = dubins_action_to_plane(action.astype(dtype), meta)
    out_planes = dubins_step_planes(planes, a_plane, meta)
    return dubins_planes_to_state(out_planes, meta)


# ----------------------------------------------------------------------------
# Pure-JAX reference
# ----------------------------------------------------------------------------
def _reference(state, action):
    x = state[..., 0:1]
    y = state[..., 1:2]
    theta = state[..., 2:3]
    return jnp.concatenate(
        [x + DT * jnp.cos(theta), y + DT * jnp.sin(theta), theta + DT * action],
        axis=-1,
    )


if __name__ == "__main__":
    key = jax.random.PRNGKey(0)
    k1, k2, k3 = jax.random.split(key, 3)

    # Small batch: 2 trajectories x 8 samples, state dim 3, action dim 1.
    state = jax.random.normal(k1, (2, 8, 3), dtype=jnp.float32)
    action = jax.random.normal(k2, (2, 8, 1), dtype=jnp.float32)

    # Single-step boundary API (jitted so allow_input_fusion can take effect).
    out = jax.jit(dubins_car_dynamics)(state, action)
    jax.block_until_ready(out)
    ref = _reference(state, action)
    assert out.shape == ref.shape and out.dtype == ref.dtype
    assert jnp.allclose(out, ref, atol=1e-5, rtol=1e-5), float(jnp.max(jnp.abs(out - ref)))

    # Multi-step rollout staying in SoA planes (AoS<->SoA conversion only at the
    # boundaries — feedback item 1).
    T = 4
    actions = jax.random.normal(k3, (T, 2, 8, 1), dtype=jnp.float32)
    planes, meta = dubins_state_to_planes(state)
    for t in range(T):
        planes = dubins_step_planes(planes, dubins_action_to_plane(actions[t], meta), meta)
    rolled = dubins_planes_to_state(planes, meta)
    jax.block_until_ready(rolled)

    ref_roll = state
    for t in range(T):
        ref_roll = _reference(ref_roll, actions[t])
    assert rolled.shape == ref_roll.shape
    assert jnp.allclose(rolled, ref_roll, atol=1e-4, rtol=1e-4), float(
        jnp.max(jnp.abs(rolled - ref_roll)))

    print("KERNEL_OK")
</pallas_src>

<mosaic_0001>
module attributes {stable_mosaic.version = 11 : i64} {
  func.func @_dubins_kernel(%arg0: i32, %arg1: memref<3x8x128xf32, #tpu.memory_space<vmem>>, %arg2: memref<1x8x128xf32, #tpu.memory_space<vmem>>, %arg3: memref<3x8x128xf32, #tpu.memory_space<vmem>>) attributes {dimension_semantics = [#tpu.dimension_semantics<parallel>], iteration_bounds = array<i64: 1>, scalar_prefetch = 0 : i64, scratch_operands = 0 : i64, tpu.core_type = #tpu.core_type<tc>, window_params = [{transform_indices = @transform_0, window_bounds = array<i64: 3, 8, 128>}, {transform_indices = @transform_1, window_bounds = array<i64: 1, 8, 128>}, {transform_indices = @transform_2, window_bounds = array<i64: 3, 8, 128>}]} {
    %c2 = arith.constant 2 : index
    %c0 = arith.constant 0 : index
    %c0_0 = arith.constant 0 : index
    %0 = vector.load %arg1[%c2, %c0, %c0_0] : memref<3x8x128xf32, #tpu.memory_space<vmem>>, vector<1x8x128xf32>
    %1 = vector.shape_cast %0 : vector<1x8x128xf32> to vector<8x128xf32>
    %cst = arith.constant 0.636619746 : f32
    %2 = vector.broadcast %cst : f32 to vector<8x128xf32>
    %3 = arith.mulf %1, %2 : vector<8x128xf32>
    %4 = math.roundeven %3 : vector<8x128xf32>
    %cst_1 = arith.constant 1.5703125 : f32
    %5 = vector.broadcast %cst_1 : f32 to vector<8x128xf32>
    %6 = arith.mulf %4, %5 : vector<8x128xf32>
    %7 = arith.subf %1, %6 : vector<8x128xf32>
    %cst_2 = arith.constant 4.83751297E-4 : f32
    %8 = vector.broadcast %cst_2 : f32 to vector<8x128xf32>
    %9 = arith.mulf %4, %8 : vector<8x128xf32>
    %10 = arith.subf %7, %9 : vector<8x128xf32>
    %cst_3 = arith.constant 7.549790e-08 : f32
    %11 = vector.broadcast %cst_3 : f32 to vector<8x128xf32>
    %12 = arith.mulf %4, %11 : vector<8x128xf32>
    %13 = arith.subf %10, %12 : vector<8x128xf32>
    %14 = arith.mulf %13, %13 : vector<8x128xf32>
    %15 = arith.mulf %13, %14 : vector<8x128xf32>
    %cst_4 = arith.constant -1.95152956E-4 : f32
    %16 = vector.broadcast %cst_4 : f32 to vector<8x128xf32>
    %17 = arith.mulf %14, %16 : vector<8x128xf32>
    %cst_5 = arith.constant 0.00833216123 : f32
    %18 = vector.broadcast %cst_5 : f32 to vector<8x128xf32>
    %19 = arith.addf %18, %17 : vector<8x128xf32>
    %20 = arith.mulf %14, %19 : vector<8x128xf32>
    %cst_6 = arith.constant -0.166666552 : f32
    %21 = vector.broadcast %cst_6 : f32 to vector<8x128xf32>
    %22 = arith.addf %21, %20 : vector<8x128xf32>
    %23 = arith.mulf %15, %22 : vector<8x128xf32>
    %24 = arith.addf %13, %23 : vector<8x128xf32>
    %cst_7 = arith.constant 5.000000e-01 : f32
    %25 = vector.broadcast %cst_7 : f32 to vector<8x128xf32>
    %26 = arith.mulf %25, %14 : vector<8x128xf32>
    %cst_8 = arith.constant 1.000000e+00 : f32
    %27 = vector.broadcast %cst_8 : f32 to vector<8x128xf32>
    %28 = arith.subf %27, %26 : vector<8x128xf32>
    %29 = arith.mulf %14, %14 : vector<8x128xf32>
    %cst_9 = arith.constant 2.44331568E-5 : f32
    %30 = vector.broadcast %cst_9 : f32 to vector<8x128xf32>
    %31 = arith.mulf %14, %30 : vector<8x128xf32>
    %cst_10 = arith.constant -0.00138873165 : f32
    %32 = vector.broadcast %cst_10 : f32 to vector<8x128xf32>
    %33 = arith.addf %32, %31 : vector<8x128xf32>
    %34 = arith.mulf %14, %33 : vector<8x128xf32>
    %cst_11 = arith.constant 0.0416666456 : f32
    %35 = vector.broadcast %cst_11 : f32 to vector<8x128xf32>
    %36 = arith.addf %35, %34 : vector<8x128xf32>
    %37 = arith.mulf %29, %36 : vector<8x128xf32>
    %38 = arith.addf %28, %37 : vector<8x128xf32>
    %39 = arith.fptosi %4 : vector<8x128xf32> to vector<8x128xi32>
    %c3_i32 = arith.constant 3 : i32
    %40 = vector.broadcast %c3_i32 : i32 to vector<8x128xi32>
    %41 = arith.andi %39, %40 : vector<8x128xi32>
    %c0_i32 = arith.constant 0 : i32
    %42 = vector.broadcast %c0_i32 : i32 to vector<8x128xi32>
    %43 = arith.cmpi eq, %41, %42 : vector<8x128xi32>
    %c1_i32 = arith.constant 1 : i32
    %44 = vector.broadcast %c1_i32 : i32 to vector<8x128xi32>
    %45 = arith.cmpi eq, %41, %44 : vector<8x128xi32>
    %c2_i32 = arith.constant 2 : i32
    %46 = vector.broadcast %c2_i32 : i32 to vector<8x128xi32>
    %47 = arith.cmpi eq, %41, %46 : vector<8x128xi32>
    %cst_12 = arith.constant 0.000000e+00 : f32
    %48 = vector.broadcast %cst_12 : f32 to vector<8x128xf32>
    %49 = arith.subf %48, %24 : vector<8x128xf32>
    %cst_13 = arith.constant 0.000000e+00 : f32
    %50 = vector.broadcast %cst_13 : f32 to vector<8x128xf32>
    %51 = arith.subf %50, %38 : vector<8x128xf32>
    %52 = arith.select %47, %49, %51 : vector<8x128xi1>, vector<8x128xf32>
    %53 = arith.select %45, %38, %52 : vector<8x128xi1>, vector<8x128xf32>
    %54 = arith.select %43, %24, %53 : vector<8x128xi1>, vector<8x128xf32>
    %c0_i32_14 = arith.constant 0 : i32
    %55 = vector.broadcast %c0_i32_14 : i32 to vector<8x128xi32>
    %56 = arith.cmpi eq, %41, %55 : vector<8x128xi32>
    %c1_i32_15 = arith.constant 1 : i32
    %57 = vector.broadcast %c1_i32_15 : i32 to vector<8x128xi32>
    %58 = arith.cmpi eq, %41, %57 : vector<8x128xi32>
    %cst_16 = arith.constant 0.000000e+00 : f32
    %59 = vector.broadcast %cst_16 : f32 to vector<8x128xf32>
    %60 = arith.subf %59, %24 : vector<8x128xf32>
    %c2_i32_17 = arith.constant 2 : i32
    %61 = vector.broadcast %c2_i32_17 : i32 to vector<8x128xi32>
    %62 = arith.cmpi eq, %41, %61 : vector<8x128xi32>
    %cst_18 = arith.constant 0.000000e+00 : f32
    %63 = vector.broadcast %cst_18 : f32 to vector<8x128xf32>
    %64 = arith.subf %63, %38 : vector<8x128xf32>
    %65 = arith.select %62, %64, %24 : vector<8x128xi1>, vector<8x128xf32>
    %66 = arith.select %58, %60, %65 : vector<8x128xi1>, vector<8x128xf32>
    %67 = arith.select %56, %38, %66 : vector<8x128xi1>, vector<8x128xf32>
    %c0_19 = arith.constant 0 : index
    %c0_20 = arith.constant 0 : index
    %c0_21 = arith.constant 0 : index
    %68 = vector.load %arg1[%c0_19, %c0_20, %c0_21] : memref<3x8x128xf32, #tpu.memory_space<vmem>>, vector<1x8x128xf32>
    %69 = vector.shape_cast %68 : vector<1x8x128xf32> to vector<8x128xf32>
    %cst_22 = arith.constant 1.000000e-01 : f32
    %70 = vector.broadcast %cst_22 : f32 to vector<8x128xf32>
    %71 = arith.mulf %70, %67 : vector<8x128xf32>
    %72 = arith.addf %69, %71 : vector<8x128xf32>
    %c0_23 = arith.constant 0 : index
    %c0_24 = arith.constant 0 : index
    %c0_25 = arith.constant 0 : index
    %73 = vector.load %arg3[%c0_23, %c0_24, %c0_25] : memref<3x8x128xf32, #tpu.memory_space<vmem>>, vector<1x8x128xf32>
    %74 = vector.shape_cast %73 : vector<1x8x128xf32> to vector<8x128xf32>
    %75 = vector.shape_cast %72 : vector<8x128xf32> to vector<1x8x128xf32>
    tpu.vector_store %arg3[%c0_23, %c0_24, %c0_25], %75 {strides = array<i32>} : memref<3x8x128xf32, #tpu.memory_space<vmem>>, vector<1x8x128xf32>,
    %c1 = arith.constant 1 : index
    %c0_26 = arith.constant 0 : index
    %c0_27 = arith.constant 0 : index
    %76 = vector.load %arg1[%c1, %c0_26, %c0_27] : memref<3x8x128xf32, #tpu.memory_space<vmem>>, vector<1x8x128xf32>
    %77 = vector.shape_cast %76 : vector<1x8x128xf32> to vector<8x128xf32>
    %cst_28 = arith.constant 1.000000e-01 : f32
    %78 = vector.broadcast %cst_28 : f32 to vector<8x128xf32>
    %79 = arith.mulf %78, %54 : vector<8x128xf32>
    %80 = arith.addf %77, %79 : vector<8x128xf32>
    %c1_29 = arith.constant 1 : index
    %c0_30 = arith.constant 0 : index
    %c0_31 = arith.constant 0 : index
    %81 = vector.load %arg3[%c1_29, %c0_30, %c0_31] : memref<3x8x128xf32, #tpu.memory_space<vmem>>, vector<1x8x128xf32>
    %82 = vector.shape_cast %81 : vector<1x8x128xf32> to vector<8x128xf32>
    %83 = vector.shape_cast %80 : vector<8x128xf32> to vector<1x8x128xf32>
    tpu.vector_store %arg3[%c1_29, %c0_30, %c0_31], %83 {strides = array<i32>} : memref<3x8x128xf32, #tpu.memory_space<vmem>>, vector<1x8x128xf32>,
    %c0_32 = arith.constant 0 : index
    %c0_33 = arith.constant 0 : index
    %c0_34 = arith.constant 0 : index
    %84 = vector.load %arg2[%c0_32, %c0_33, %c0_34] : memref<1x8x128xf32, #tpu.memory_space<vmem>>, vector<1x8x128xf32>
    %85 = vector.shape_cast %84 : vector<1x8x128xf32> to vector<8x128xf32>
    %cst_35 = arith.constant 1.000000e-01 : f32
    %86 = vector.broadcast %cst_35 : f32 to vector<8x128xf32>
    %87 = arith.mulf %86, %85 : vector<8x128xf32>
    %88 = arith.addf %1, %87 : vector<8x128xf32>
    %c2_36 = arith.constant 2 : index
    %c0_37 = arith.constant 0 : index
    %c0_38 = arith.constant 0 : index
    %89 = vector.load %arg3[%c2_36, %c0_37, %c0_38] : memref<3x8x128xf32, #tpu.memory_space<vmem>>, vector<1x8x128xf32>
    %90 = vector.shape_cast %89 : vector<1x8x128xf32> to vector<8x128xf32>
    %91 = vector.shape_cast %88 : vector<8x128xf32> to vector<1x8x128xf32>
    tpu.vector_store %arg3[%c2_36, %c0_37, %c0_38], %91 {strides = array<i32>} : memref<3x8x128xf32, #tpu.memory_space<vmem>>, vector<1x8x128xf32>,
    return
  }
  func.func @transform_0(%arg0: i32) -> (i32, i32, i32) {
    %c0_i32 = arith.constant 0 : i32
    %c0_i32_0 = arith.constant 0 : i32
    %c0_i32_1 = arith.constant 0 : i32
    return %c0_i32, %arg0, %c0_i32_0 : i32, i32, i32
  }
  func.func @transform_1(%arg0: i32) -> (i32, i32, i32) {
    %c0_i32 = arith.constant 0 : i32
    %c0_i32_0 = arith.constant 0 : i32
    %c0_i32_1 = arith.constant 0 : i32
    return %c0_i32, %arg0, %c0_i32_0 : i32, i32, i32
  }
  func.func @transform_2(%arg0: i32) -> (i32, i32, i32) {
    %c0_i32 = arith.constant 0 : i32
    %c0_i32_0 = arith.constant 0 : i32
    %c0_i32_1 = arith.constant 0 : i32
    return %c0_i32, %arg0, %c0_i32_0 : i32, i32, i32
  }
}

</mosaic_0001>

<llo_original>
// kernel: dubins_car_dynamics.2
$region0: #{dubins_car_dynamics.2}
  #allocation0 [shape = 'u32[]', space=smem, size = 0x4, offset = 0x4, fixed_abs, tag = 'smem constant byte address 0x4 - core index']
  #allocation1 [shape = 'u32[144,128]{1,0:T(1,128)}', space=vmem, size = 0x12000, scoped, tag = 'internal scratch']
  %s0 = inlined_call_operand.vmem [shape: f32[1,8,128], index: 0, kind: input, shape index: {}]
  %s1 = inlined_call_operand.vmem [shape: f32[1,3,8,128], index: 1, kind: input, shape index: {}]
  %s2 = inlined_call_operand.vmem [shape: f32[3,8,128], index: 2, kind: output, shape index: {}]
  %s3 = sld [smem:[#allocation0]]
  $region18: #{dubins_car_dynamics.2} parent=0
    _
  %s5 = ssub.s32 1, %s3
  %s6 = scalar_select 0, %s5, %s3
  $region1: #{dubins_car_dynamics.2} parent=0
    #allocation2 [shape = 'u8[12288]{0}', space=vmem, size = 0x3000, dematerialized = true, scoped, tag = 'FusionAdapter Buffer %fusion.1 = f32[3,8,128]{2,1,0:T(8,128)} fusion(%param_1.2), kind=kLoop, calls=%fused_computation.3.clone, metadata={op_name="jit(dubins_car_dynamics)/reshape" stack_frame_id=14}']
    // Predicated region
    $region2: #{dubins_car_dynamics.2} parent=1 // pred_check
      _
    $region3: #{dubins_car_dynamics.2} parent=1 // pred_check_branch
      %8 = sbr.rel (0) target = $region5
    $region4: #{dubins_car_dynamics.2} parent=1 // pred_region
      _
    $region5: #{dubins_car_dynamics.2} parent=1 // pred_fallthru
      _
    // Predicated region
    $region6: #{dubins_car_dynamics.2} parent=1 // pred_check
      _
    $region7: #{dubins_car_dynamics.2} parent=1 // pred_check_branch
      %10 = sbr.rel (0) target = $region9
    $region8: #{dubins_car_dynamics.2} parent=1 // pred_region
      _
    $region9: #{dubins_car_dynamics.2} parent=1 // pred_fallthru
      _
    %v11 = vld [vmem:[%s1] sm:$0xff]
    %13 = vst [vmem:[#allocation2] sm:$0xff] %v11
    %s14 = scalar_lea.vmem %s1, 8
    %v15 = vld [vmem:[%s14] sm:$0xff]
    %s16 = scalar_lea.vmem [#allocation2], 8
    %18 = vst [vmem:[%s16] sm:$0xff] %v15
    %s19 = scalar_lea.vmem %s1, 16
    %v20 = vld [vmem:[%s19] sm:$0xff]
    %s21 = scalar_lea.vmem [#allocation2], 16
    %23 = vst [vmem:[%s21] sm:$0xff] %v20
    %s24 = scalar_lea.vmem [#allocation2], 16
    %v25 = vld [vmem:[%s24] sm:$0xff]
    %v26 = vmul.f32 %v25, 0.63661975
    %v27 = vround.ne.pseudo %v26
    %v28 = vmul.f32 %v27, 1.5703125
    %v29 = vsub.f32 %v25, %v28
    %v30 = vmul.f32 %v27, 0.0004837513
    %v31 = vsub.f32 %v29, %v30
    %v32 = vmul.f32 %v27, 7.54979e-08
    %v33 = vsub.f32 %v31, %v32
    %v34 = vmul.f32 %v33, %v33
    %v35 = vmul.f32 %v33, %v34
    %v36 = vmul.f32 %v34, -0.00019515296
    %v37 = vadd.f32 %v36, 0.008332161
    %v38 = vmul.f32 %v34, %v37
    %v39 = vadd.f32 %v38, -0.16666655
    %v40 = vmul.f32 %v35, %v39
    %v41 = vadd.f32 %v33, %v40
    %v42 = vmul.f32 %v34, 0.5
    %v43 = vsub.f32 1.0, %v42
    %v44 = vmul.f32 %v34, %v34
    %v45 = vmul.f32 %v34, 2.4433157e-05
    %v46 = vadd.f32 %v45, -0.0013887316
    %v47 = vmul.f32 %v34, %v46
    %v48 = vadd.f32 %v47, 0.041666646
    %v49 = vmul.f32 %v44, %v48
    %v50 = vadd.f32 %v43, %v49
    %v51 = vcvt.f32.s32.ties.to.even %v26
    %v52 = vand.u32 %v51, 3
    %vm53 = vcmp.eq.s32.totalorder %v52, 0
    %vm54 = vcmp.eq.s32.totalorder %v52, 1
    %vm55 = vcmp.eq.s32.totalorder %v52, 2
    %v56 = vsub.f32 0.0, %v41
    %v57 = vsub.f32 0.0, %v50
    %v58 = vsel %vm55, %v56, %v57
    %v59 = vsel %vm54, %v50, %v58
    %v60 = vsel %vm53, %v41, %v59
    %v61 = vsel %vm55, %v57, %v41
    %v62 = vsel %vm54, %v56, %v61
    %v63 = vsel %vm53, %v50, %v62
    %v64 = vld [vmem:[#allocation2] sm:$0xff]
    %v65 = vmul.f32 %v63, 0.1
    %v66 = vadd.f32 %v64, %v65
    %67 = vst [vmem:[%s2] sm:$0xff] %v66
    %s68 = scalar_lea.vmem [#allocation2], 8
    %v69 = vld [vmem:[%s68] sm:$0xff]
    %v70 = vmul.f32 %v60, 0.1
    %v71 = vadd.f32 %v69, %v70
    %s72 = scalar_lea.vmem %s2, 8
    %73 = vst [vmem:[%s72] sm:$0xff] %v71
    %v74 = vld [vmem:[%s0] sm:$0xff]
    %v75 = vmul.f32 %v74, 0.1
    %v76 = vadd.f32 %v25, %v75
    %s77 = scalar_lea.vmem %s2, 16
    %78 = vst [vmem:[%s77] sm:$0xff] %v76
    // Predicated region
    $region10: #{dubins_car_dynamics.2} parent=1 // pred_check
      _
    $region11: #{dubins_car_dynamics.2} parent=1 // pred_check_branch
      %80 = sbr.rel (0) target = $region13
    $region12: #{dubins_car_dynamics.2} parent=1 // pred_region
      _
    $region13: #{dubins_car_dynamics.2} parent=1 // pred_fallthru
      _
    // Predicated region
    $region14: #{dubins_car_dynamics.2} parent=1 // pred_check
      _
    $region15: #{dubins_car_dynamics.2} parent=1 // pred_check_branch
      %82 = sbr.rel (0) target = $region17
    $region16: #{dubins_car_dynamics.2} parent=1 // pred_region
      _
    $region17: #{dubins_car_dynamics.2} parent=1 // pred_fallthru
      _

</llo_original>
